<compile_context>
chip_gen: v5e
topology: v5e:2x2
jax: 0.10.0
libtpu: 0.0.40
codegen_flags: <defaults>
</compile_context>

<pallas_src>
import functools

import jax
import jax.numpy as jnp
from jax.experimental import pallas as pl
from jax.experimental.pallas import tpu as pltpu


def _round_up(v, m):
    return -(-v // m) * m


def mlp_kernel(*refs, n_hidden_layers, compute_dtype):
    if n_hidden_layers > 0:
        x_ref, w1_ref, b1_ref, wh_ref, bh_ref, wf_ref, bf_ref, o_ref = refs
    else:
        x_ref, w1_ref, b1_ref, wf_ref, bf_ref, o_ref = refs
        wh_ref = bh_ref = None

    # layer1 + ReLU: h_T = W1 @ x_T  (MXU, f32 accumulation; N = tb lane-dense)
    h = jnp.dot(w1_ref[...], x_ref[...],
                preferred_element_type=jnp.float32) + b1_ref[...]
    h = jnp.maximum(h, 0.0)

    # hidden layers + ReLU (static unroll; n_hidden_layers known at trace time)
    for i in range(n_hidden_layers):
        h = jnp.dot(wh_ref[i], h.astype(compute_dtype),
                    preferred_element_type=jnp.float32) + bh_ref[i]
        h = jnp.maximum(h, 0.0)

    # final layer + Sigmoid (lane-dense [out_dim, tb] store)
    out = jnp.dot(wf_ref[...], h.astype(compute_dtype),
                  preferred_element_type=jnp.float32) + bf_ref[...]
    o_ref[...] = jax.nn.sigmoid(out).astype(o_ref.dtype)


def mlp_forward(x, params, *, batch_tile=2048, compute_dtype=jnp.bfloat16,
                out_dtype=jnp.float32):
    """NeuralNetwork_Adjustable forward pass as one fused Pallas kernel.

    x: [B, input_size] (batch-major, any float dtype)
    params: (w1, b1, wh, bh, wf, bf) in PyTorch layout:
        w1 [nnodes, in], b1 [nnodes, 1], wh [n_hidden, nnodes, nnodes],
        bh [n_hidden, nnodes, 1], wf [out, nnodes], bf [out, 1]
    Returns [B, output_size] in out_dtype.
    """
    w1, b1, wh, bh, wf, bf = params
    B, in_dim = x.shape
    nnodes = w1.shape[0]
    out_dim = wf.shape[0]
    n_hidden = wh.shape[0]

    # Feature-major input: one fused transpose+cast XLA pass; the kernel then
    # streams a lane-dense (in_dim, tb) block per grid step.
    x_t = x.T.astype(compute_dtype)

    # Batch tile on the lane axis: multiple of 128 (or full B for tiny batches).
    # For B > 128 cap so there are >= 2 grid steps (v7x: 2 TensorCores).
    if B <= 128:
        tb = B
    else:
        cap = _round_up(pl.cdiv(B, 2), 128)
        tb = min(max(_round_up(batch_tile, 128), 128), cap)
    grid = (pl.cdiv(B, tb),)

    # MXU operands in compute_dtype (weights are tiny & grid-invariant, so a
    # one-time wrapper cast is fine); biases stay f32 (f32 epilogue math).
    w1c = w1.astype(compute_dtype)
    wfc = wf.astype(compute_dtype)
    b1f = b1.astype(jnp.float32)
    bff = bf.astype(jnp.float32)

    in_arrays = [x_t, w1c, b1f]
    in_specs = [
        pl.BlockSpec((in_dim, tb), lambda i: (0, i)),          # x_T (streamed)
        pl.BlockSpec((nnodes, in_dim), lambda i: (0, 0)),      # w1 (resident)
        pl.BlockSpec((nnodes, 1), lambda i: (0, 0)),           # b1
    ]
    if n_hidden > 0:
        in_arrays += [wh.astype(compute_dtype), bh.astype(jnp.float32)]
        in_specs += [
            pl.BlockSpec((n_hidden, nnodes, nnodes), lambda i: (0, 0, 0)),  # wh
            pl.BlockSpec((n_hidden, nnodes, 1), lambda i: (0, 0, 0)),       # bh
        ]
    in_arrays += [wfc, bff]
    in_specs += [
        pl.BlockSpec((out_dim, nnodes), lambda i: (0, 0)),     # wf
        pl.BlockSpec((out_dim, 1), lambda i: (0, 0)),          # bf
    ]

    kernel = functools.partial(mlp_kernel,
                               n_hidden_layers=n_hidden,
                               compute_dtype=compute_dtype)

    # NOTE: last grid step may be a partial block; OOB batch columns are
    # garbage on load and masked on store — safe because columns never mix.
    out_t = pl.pallas_call(
        kernel,
        out_shape=jax.ShapeDtypeStruct((out_dim, B), out_dtype),
        grid=grid,
        in_specs=in_specs,
        out_specs=pl.BlockSpec((out_dim, tb), lambda i: (0, i)),
        compiler_params=pltpu.CompilerParams(
            dimension_semantics=("parallel",)),
    )(*in_arrays)

    return out_t.T  # back to batch-major [B, out_dim]


def init_params(key, input_size, output_size, n_hidden_layers, nnodes,
                init_weights=True):
    """Deterministic parameter init mirroring the module's __init__ shapes.

    Weights are stored in PyTorch layout [out_features, in_features]; biases
    as column vectors [out_features, 1].  `init_weights=True` branch: layer1 /
    hidden weights ~ U(-sqrt(3)/nnodes, +), final weights ~ U(-0.05, 0.05).
    Biases use PyTorch's default Linear bias init U(-1/sqrt(fan_in), +).
    """
    # Replicate the "if i + 2 == nnodes: break" truncation from __init__.
    n_eff = 0
    for i in range(n_hidden_layers):
        if i + 2 == nnodes:
            break
        n_eff += 1

    keys = jax.random.split(key, 6)
    a = (3.0 ** 0.5) / nnodes
    w1 = jax.random.uniform(keys[0], (nnodes, input_size), jnp.float32, -a, a)
    b1 = jax.random.uniform(keys[1], (nnodes, 1), jnp.float32,
                            -1.0 / input_size ** 0.5, 1.0 / input_size ** 0.5)
    wh = jax.random.uniform(keys[2], (n_eff, nnodes, nnodes), jnp.float32, -a, a)
    bh = jax.random.uniform(keys[3], (n_eff, nnodes, 1), jnp.float32,
                            -1.0 / nnodes ** 0.5, 1.0 / nnodes ** 0.5)
    wf = jax.random.uniform(keys[4], (output_size, nnodes), jnp.float32,
                            -0.05, 0.05)
    bf = jax.random.uniform(keys[5], (output_size, 1), jnp.float32,
                            -1.0 / nnodes ** 0.5, 1.0 / nnodes ** 0.5)
    return w1, b1, wh, bh, wf, bf


def mlp_reference(x, params):
    """Pure-JAX reference (PyTorch semantics, batch-major)."""
    w1, b1, wh, bh, wf, bf = params
    h = jnp.maximum(x @ w1.T + b1[:, 0], 0.0)
    for i in range(wh.shape[0]):
        h = jnp.maximum(h @ wh[i].T + bh[i, :, 0], 0.0)
    return jax.nn.sigmoid(h @ wf.T + bf[:, 0])


if __name__ == "__main__":
    key = jax.random.PRNGKey(0)
    k_x, k_p, k_x2, k_p0 = jax.random.split(key, 4)

    # Small shapes consistent with the module: input_size=16, output_size=8,
    # n_hidden_layers=4, nnodes=32.
    input_size, output_size = 16, 8
    n_hidden_layers, nnodes = 4, 32
    params = init_params(k_p, input_size, output_size, n_hidden_layers, nnodes)

    # --- tiny batch, f32 path (strict tolerance) ---
    batch = 8
    x = jax.random.normal(k_x, (batch, input_size), jnp.float32)
    out_f32 = jax.block_until_ready(
        mlp_forward(x, params, compute_dtype=jnp.float32))
    ref = mlp_reference(x, params)
    assert out_f32.shape == (batch, output_size)
    assert jnp.allclose(out_f32, ref, atol=2e-5, rtol=2e-5)

    # --- tiny batch, bf16 MXU path (loose tolerance) ---
    out_bf16 = jax.block_until_ready(mlp_forward(x, params))
    assert jnp.allclose(out_bf16, ref, atol=2e-2, rtol=2e-2)

    # --- ragged batch: 2 parallel grid steps, masked partial last block ---
    batch2 = 1000
    x2 = jax.random.normal(k_x2, (batch2, input_size), jnp.float32)
    out2 = jax.block_until_ready(mlp_forward(x2, params))
    ref2 = mlp_reference(x2, params)
    assert out2.shape == (batch2, output_size)
    assert jnp.allclose(out2, ref2, atol=2e-2, rtol=2e-2)

    # --- n_hidden == 0 guard (hidden operands omitted from pallas_call) ---
    params0 = init_params(k_p0, input_size, output_size, 0, nnodes)
    out0 = jax.block_until_ready(
        mlp_forward(x, params0, compute_dtype=jnp.float32))
    ref0 = mlp_reference(x, params0)
    assert jnp.allclose(out0, ref0, atol=2e-5, rtol=2e-5)

    print("KERNEL_OK")
</pallas_src>

<mosaic_0001>
module attributes {stable_mosaic.version = 11 : i64} {
  func.func @mlp_kernel(%arg0: i32, %arg1: memref<16x8xf32, #tpu.memory_space<vmem>>, %arg2: memref<32x16xf32, #tpu.memory_space<vmem>>, %arg3: memref<32x1xf32, #tpu.memory_space<vmem>>, %arg4: memref<4x32x32xf32, #tpu.memory_space<vmem>>, %arg5: memref<4x32x1xf32, #tpu.memory_space<vmem>>, %arg6: memref<8x32xf32, #tpu.memory_space<vmem>>, %arg7: memref<8x1xf32, #tpu.memory_space<vmem>>, %arg8: memref<8x8xf32, #tpu.memory_space<vmem>>) attributes {dimension_semantics = [#tpu.dimension_semantics<parallel>], iteration_bounds = array<i64: 1>, scalar_prefetch = 0 : i64, scratch_operands = 0 : i64, tpu.core_type = #tpu.core_type<tc>, window_params = [{transform_indices = @transform_0, window_bounds = array<i64: 16, 8>}, {pipeline_mode = #tpu.pipeline_mode<synchronous>, transform_indices = @transform_1, window_bounds = array<i64: 32, 16>}, {pipeline_mode = #tpu.pipeline_mode<synchronous>, transform_indices = @transform_2, window_bounds = array<i64: 32, 1>}, {pipeline_mode = #tpu.pipeline_mode<synchronous>, transform_indices = @transform_3, window_bounds = array<i64: 4, 32, 32>}, {pipeline_mode = #tpu.pipeline_mode<synchronous>, transform_indices = @transform_4, window_bounds = array<i64: 4, 32, 1>}, {pipeline_mode = #tpu.pipeline_mode<synchronous>, transform_indices = @transform_5, window_bounds = array<i64: 8, 32>}, {pipeline_mode = #tpu.pipeline_mode<synchronous>, transform_indices = @transform_6, window_bounds = array<i64: 8, 1>}, {transform_indices = @transform_7, window_bounds = array<i64: 8, 8>}]} {
    %c0 = arith.constant 0 : index
    %c0_0 = arith.constant 0 : index
    %0 = vector.load %arg2[%c0, %c0_0] : memref<32x16xf32, #tpu.memory_space<vmem>>, vector<32x16xf32>
    %c0_1 = arith.constant 0 : index
    %c0_2 = arith.constant 0 : index
    %1 = vector.load %arg1[%c0_1, %c0_2] : memref<16x8xf32, #tpu.memory_space<vmem>>, vector<16x8xf32>
    %cst = arith.constant dense<0.000000e+00> : vector<32x8xf32>
    %2 = tpu.matmul %0, %1, %cst {dimension_numbers = #tpu.dot_dimension_numbers<[1], [0], [0], [1], [0, 0, 1, 1], [], []>} : vector<32x16xf32>, vector<16x8xf32>, vector<32x8xf32> -> vector<32x8xf32>
    %c0_3 = arith.constant 0 : index
    %c0_4 = arith.constant 0 : index
    %3 = vector.load %arg3[%c0_3, %c0_4] : memref<32x1xf32, #tpu.memory_space<vmem>>, vector<32x1xf32>
    %4 = vector.broadcast %3 : vector<32x1xf32> to vector<32x8xf32>
    %5 = arith.addf %2, %4 : vector<32x8xf32>
    %cst_5 = arith.constant 0.000000e+00 : f32
    %6 = vector.broadcast %cst_5 : f32 to vector<32x8xf32>
    %7 = arith.maximumf %5, %6 : vector<32x8xf32>
    %c0_6 = arith.constant 0 : index
    %c0_7 = arith.constant 0 : index
    %c0_8 = arith.constant 0 : index
    %8 = vector.load %arg4[%c0_6, %c0_7, %c0_8] : memref<4x32x32xf32, #tpu.memory_space<vmem>>, vector<1x32x32xf32>
    %9 = vector.shape_cast %8 : vector<1x32x32xf32> to vector<32x32xf32>
    %cst_9 = arith.constant dense<0.000000e+00> : vector<32x8xf32>
    %10 = tpu.matmul %9, %7, %cst_9 {dimension_numbers = #tpu.dot_dimension_numbers<[1], [0], [0], [1], [0, 0, 1, 1], [], []>} : vector<32x32xf32>, vector<32x8xf32>, vector<32x8xf32> -> vector<32x8xf32>
    %c0_10 = arith.constant 0 : index
    %c0_11 = arith.constant 0 : index
    %c0_12 = arith.constant 0 : index
    %11 = vector.load %arg5[%c0_10, %c0_11, %c0_12] : memref<4x32x1xf32, #tpu.memory_space<vmem>>, vector<1x32x1xf32>
    %12 = vector.shape_cast %11 : vector<1x32x1xf32> to vector<32x1xf32>
    %13 = vector.broadcast %12 : vector<32x1xf32> to vector<32x8xf32>
    %14 = arith.addf %10, %13 : vector<32x8xf32>
    %cst_13 = arith.constant 0.000000e+00 : f32
    %15 = vector.broadcast %cst_13 : f32 to vector<32x8xf32>
    %16 = arith.maximumf %14, %15 : vector<32x8xf32>
    %c1 = arith.constant 1 : index
    %c0_14 = arith.constant 0 : index
    %c0_15 = arith.constant 0 : index
    %17 = vector.load %arg4[%c1, %c0_14, %c0_15] : memref<4x32x32xf32, #tpu.memory_space<vmem>>, vector<1x32x32xf32>
    %18 = vector.shape_cast %17 : vector<1x32x32xf32> to vector<32x32xf32>
    %cst_16 = arith.constant dense<0.000000e+00> : vector<32x8xf32>
    %19 = tpu.matmul %18, %16, %cst_16 {dimension_numbers = #tpu.dot_dimension_numbers<[1], [0], [0], [1], [0, 0, 1, 1], [], []>} : vector<32x32xf32>, vector<32x8xf32>, vector<32x8xf32> -> vector<32x8xf32>
    %c1_17 = arith.constant 1 : index
    %c0_18 = arith.constant 0 : index
    %c0_19 = arith.constant 0 : index
    %20 = vector.load %arg5[%c1_17, %c0_18, %c0_19] : memref<4x32x1xf32, #tpu.memory_space<vmem>>, vector<1x32x1xf32>
    %21 = vector.shape_cast %20 : vector<1x32x1xf32> to vector<32x1xf32>
    %22 = vector.broadcast %21 : vector<32x1xf32> to vector<32x8xf32>
    %23 = arith.addf %19, %22 : vector<32x8xf32>
    %cst_20 = arith.constant 0.000000e+00 : f32
    %24 = vector.broadcast %cst_20 : f32 to vector<32x8xf32>
    %25 = arith.maximumf %23, %24 : vector<32x8xf32>
    %c2 = arith.constant 2 : index
    %c0_21 = arith.constant 0 : index
    %c0_22 = arith.constant 0 : index
    %26 = vector.load %arg4[%c2, %c0_21, %c0_22] : memref<4x32x32xf32, #tpu.memory_space<vmem>>, vector<1x32x32xf32>
    %27 = vector.shape_cast %26 : vector<1x32x32xf32> to vector<32x32xf32>
    %cst_23 = arith.constant dense<0.000000e+00> : vector<32x8xf32>
    %28 = tpu.matmul %27, %25, %cst_23 {dimension_numbers = #tpu.dot_dimension_numbers<[1], [0], [0], [1], [0, 0, 1, 1], [], []>} : vector<32x32xf32>, vector<32x8xf32>, vector<32x8xf32> -> vector<32x8xf32>
    %c2_24 = arith.constant 2 : index
    %c0_25 = arith.constant 0 : index
    %c0_26 = arith.constant 0 : index
    %29 = vector.load %arg5[%c2_24, %c0_25, %c0_26] : memref<4x32x1xf32, #tpu.memory_space<vmem>>, vector<1x32x1xf32>
    %30 = vector.shape_cast %29 : vector<1x32x1xf32> to vector<32x1xf32>
    %31 = vector.broadcast %30 : vector<32x1xf32> to vector<32x8xf32>
    %32 = arith.addf %28, %31 : vector<32x8xf32>
    %cst_27 = arith.constant 0.000000e+00 : f32
    %33 = vector.broadcast %cst_27 : f32 to vector<32x8xf32>
    %34 = arith.maximumf %32, %33 : vector<32x8xf32>
    %c3 = arith.constant 3 : index
    %c0_28 = arith.constant 0 : index
    %c0_29 = arith.constant 0 : index
    %35 = vector.load %arg4[%c3, %c0_28, %c0_29] : memref<4x32x32xf32, #tpu.memory_space<vmem>>, vector<1x32x32xf32>
    %36 = vector.shape_cast %35 : vector<1x32x32xf32> to vector<32x32xf32>
    %cst_30 = arith.constant dense<0.000000e+00> : vector<32x8xf32>
    %37 = tpu.matmul %36, %34, %cst_30 {dimension_numbers = #tpu.dot_dimension_numbers<[1], [0], [0], [1], [0, 0, 1, 1], [], []>} : vector<32x32xf32>, vector<32x8xf32>, vector<32x8xf32> -> vector<32x8xf32>
    %c3_31 = arith.constant 3 : index
    %c0_32 = arith.constant 0 : index
    %c0_33 = arith.constant 0 : index
    %38 = vector.load %arg5[%c3_31, %c0_32, %c0_33] : memref<4x32x1xf32, #tpu.memory_space<vmem>>, vector<1x32x1xf32>
    %39 = vector.shape_cast %38 : vector<1x32x1xf32> to vector<32x1xf32>
    %40 = vector.broadcast %39 : vector<32x1xf32> to vector<32x8xf32>
    %41 = arith.addf %37, %40 : vector<32x8xf32>
    %cst_34 = arith.constant 0.000000e+00 : f32
    %42 = vector.broadcast %cst_34 : f32 to vector<32x8xf32>
    %43 = arith.maximumf %41, %42 : vector<32x8xf32>
    %c0_35 = arith.constant 0 : index
    %c0_36 = arith.constant 0 : index
    %44 = vector.load %arg6[%c0_35, %c0_36] : memref<8x32xf32, #tpu.memory_space<vmem>>, vector<8x32xf32>
    %cst_37 = arith.constant dense<0.000000e+00> : vector<8x8xf32>
    %45 = tpu.matmul %44, %43, %cst_37 {dimension_numbers = #tpu.dot_dimension_numbers<[1], [0], [0], [1], [0, 0, 1, 1], [], []>} : vector<8x32xf32>, vector<32x8xf32>, vector<8x8xf32> -> vector<8x8xf32>
    %c0_38 = arith.constant 0 : index
    %c0_39 = arith.constant 0 : index
    %46 = vector.load %arg7[%c0_38, %c0_39] : memref<8x1xf32, #tpu.memory_space<vmem>>, vector<8x1xf32>
    %47 = vector.broadcast %46 : vector<8x1xf32> to vector<8x8xf32>
    %48 = arith.addf %45, %47 : vector<8x8xf32>
    %49 = arith.negf %48 : vector<8x8xf32>
    %50 = math.exp %49 : vector<8x8xf32>
    %cst_40 = arith.constant 1.000000e+00 : f32
    %51 = vector.broadcast %cst_40 : f32 to vector<8x8xf32>
    %52 = arith.addf %51, %50 : vector<8x8xf32>
    %53 = arith.divf %51, %52 : vector<8x8xf32>
    %c0_41 = arith.constant 0 : index
    %c0_42 = arith.constant 0 : index
    %54 = vector.load %arg8[%c0_41, %c0_42] : memref<8x8xf32, #tpu.memory_space<vmem>>, vector<8x8xf32>
    tpu.vector_store %arg8[%c0_41, %c0_42], %53 {strides = array<i32>} : memref<8x8xf32, #tpu.memory_space<vmem>>, vector<8x8xf32>,
    return
  }
  func.func @transform_0(%arg0: i32) -> (i32, i32) {
    %c0_i32 = arith.constant 0 : i32
    %c0_i32_0 = arith.constant 0 : i32
    return %c0_i32, %arg0 : i32, i32
  }
  func.func @transform_1(%arg0: i32) -> (i32, i32) {
    %c0_i32 = arith.constant 0 : i32
    %c0_i32_0 = arith.constant 0 : i32
    %c0_i32_1 = arith.constant 0 : i32
    return %c0_i32, %c0_i32_0 : i32, i32
  }
  func.func @transform_2(%arg0: i32) -> (i32, i32) {
    %c0_i32 = arith.constant 0 : i32
    %c0_i32_0 = arith.constant 0 : i32
    %c0_i32_1 = arith.constant 0 : i32
    return %c0_i32, %c0_i32_0 : i32, i32
  }
  func.func @transform_3(%arg0: i32) -> (i32, i32, i32) {
    %c0_i32 = arith.constant 0 : i32
    %c0_i32_0 = arith.constant 0 : i32
    %c0_i32_1 = arith.constant 0 : i32
    %c0_i32_2 = arith.constant 0 : i32
    return %c0_i32, %c0_i32_0, %c0_i32_1 : i32, i32, i32
  }
  func.func @transform_4(%arg0: i32) -> (i32, i32, i32) {
    %c0_i32 = arith.constant 0 : i32
    %c0_i32_0 = arith.constant 0 : i32
    %c0_i32_1 = arith.constant 0 : i32
    %c0_i32_2 = arith.constant 0 : i32
    return %c0_i32, %c0_i32_0, %c0_i32_1 : i32, i32, i32
  }
  func.func @transform_5(%arg0: i32) -> (i32, i32) {
    %c0_i32 = arith.constant 0 : i32
    %c0_i32_0 = arith.constant 0 : i32
    %c0_i32_1 = arith.constant 0 : i32
    return %c0_i32, %c0_i32_0 : i32, i32
  }
  func.func @transform_6(%arg0: i32) -> (i32, i32) {
    %c0_i32 = arith.constant 0 : i32
    %c0_i32_0 = arith.constant 0 : i32
    %c0_i32_1 = arith.constant 0 : i32
    return %c0_i32, %c0_i32_0 : i32, i32
  }
  func.func @transform_7(%arg0: i32) -> (i32, i32) {
    %c0_i32 = arith.constant 0 : i32
    %c0_i32_0 = arith.constant 0 : i32
    return %c0_i32, %arg0 : i32, i32
  }
}

</mosaic_0001>

<llo_original>
// kernel: tpu_custom_call.1
$region0: #{tpu_custom_call.1}
  #allocation0 [shape = 'u32[]', space=smem, size = 0x4, offset = 0x4, fixed_abs, tag = 'smem constant byte address 0x4 - core index']
  #allocation1 [shape = 'u32[72,128]{1,0:T(1,128)}', space=vmem, size = 0x9000, scoped, tag = 'internal scratch']
  %s0 = inlined_call_operand.vmem [shape: f32[16,8], index: 0, kind: input, shape index: {}]
  %s1 = inlined_call_operand.vmem [shape: f32[32,16], index: 1, kind: input, shape index: {}]
  %s2 = inlined_call_operand.vmem [shape: f32[32,1], index: 2, kind: input, shape index: {}]
  %s3 = inlined_call_operand.vmem [shape: f32[4,32,32], index: 3, kind: input, shape index: {}]
  %s4 = inlined_call_operand.vmem [shape: f32[4,32,1], index: 4, kind: input, shape index: {}]
  %s5 = inlined_call_operand.vmem [shape: f32[8,32], index: 5, kind: input, shape index: {}]
  %s6 = inlined_call_operand.vmem [shape: f32[8,1], index: 6, kind: input, shape index: {}]
  %s7 = inlined_call_operand.hbm [shape: f32[8,8], index: 7, kind: output, shape index: {}]
  %s8 = sld [smem:[#allocation0]]
  $region38: #{tpu_custom_call.1} parent=0
    _
  %s10 = ssub.s32 1, %s8
  %s11 = scalar_select 0, %s10, %s8
  $region1: #{tpu_custom_call.1} parent=0
    #allocation2 [shape = 'u8[4096]{0}', space=vmem, size = 0x1000, scoped, tag = 'output window, operand 0, single buffered']
    #allocation3 [shape = 's32[1]{0}', space=sflag, size = 0x4, scoped, tag = 'scoped memory for tpu_custom_call.1']
    %12 = vsyncpa [#allocation3], 0
    // Predicated region
    $region2: #{tpu_custom_call.1} parent=1 // pred_check
      _
    $region3: #{tpu_custom_call.1} parent=1 // pred_check_branch
      %14 = sbr.rel (0) target = $region5
    $region4: #{tpu_custom_call.1} parent=1 // pred_region
      _
    $region5: #{tpu_custom_call.1} parent=1 // pred_fallthru
      _
    // Predicated region
    $region6: #{tpu_custom_call.1} parent=1 // pred_check
      _
    $region7: #{tpu_custom_call.1} parent=1 // pred_check_branch
      %16 = sbr.rel (0) target = $region9
    $region8: #{tpu_custom_call.1} parent=1 // pred_region
      _
    $region9: #{tpu_custom_call.1} parent=1 // pred_fallthru
      _
    // Predicated region
    $region10: #{tpu_custom_call.1} parent=1 // pred_check
      _
    $region11: #{tpu_custom_call.1} parent=1 // pred_check_branch
      %18 = sbr.rel (0) target = $region13
    $region12: #{tpu_custom_call.1} parent=1 // pred_region
      _
    $region13: #{tpu_custom_call.1} parent=1 // pred_fallthru
      _
    // Predicated region
    $region14: #{tpu_custom_call.1} parent=1 // pred_check
      _
    $region15: #{tpu_custom_call.1} parent=1 // pred_check_branch
      %20 = sbr.rel (0) target = $region17
    $region16: #{tpu_custom_call.1} parent=1 // pred_region
      _
    $region17: #{tpu_custom_call.1} parent=1 // pred_fallthru
      _
    // Predicated region
    $region18: #{tpu_custom_call.1} parent=1 // pred_check
      _
    $region19: #{tpu_custom_call.1} parent=1 // pred_check_branch
      %22 = sbr.rel (0) target = $region21
    $region20: #{tpu_custom_call.1} parent=1 // pred_region
      _
    $region21: #{tpu_custom_call.1} parent=1 // pred_fallthru
      _
    // Predicated region
    $region22: #{tpu_custom_call.1} parent=1 // pred_check
      _
    $region23: #{tpu_custom_call.1} parent=1 // pred_check_branch
      %24 = sbr.rel (0) target = $region25
    $region24: #{tpu_custom_call.1} parent=1 // pred_region
      _
    $region25: #{tpu_custom_call.1} parent=1 // pred_fallthru
      _
    // Predicated region
    $region26: #{tpu_custom_call.1} parent=1 // pred_check
      _
    $region27: #{tpu_custom_call.1} parent=1 // pred_check_branch
      %26 = sbr.rel (0) target = $region29
    $region28: #{tpu_custom_call.1} parent=1 // pred_region
      _
    $region29: #{tpu_custom_call.1} parent=1 // pred_fallthru
      _
    %v27 = vld [vmem:[%s1] sm:$0xff]
    %v28 = vld [vmem:[%s1 + $0x8] sm:$0xff]
    %v29 = vld [vmem:[%s1 + $0x10] sm:$0xff]
    %v30 = vld [vmem:[%s1 + $0x18] sm:$0xff]
    %v31 = vld [vmem:[%s0] sm:$0xff]
    %v32 = vld [vmem:[%s0 + $0x8] sm:$0xff]
    %v33 = vld [vmem:[%s2] sm:$0xff]
    %v34 = vld [vmem:[%s2 + $0x8] sm:$0xff]
    %v35 = vld [vmem:[%s2 + $0x10] sm:$0xff]
    %v36 = vld [vmem:[%s2 + $0x18] sm:$0xff]
    %38 = vset.pattern.permute.xlu0 0
    %39 = vperm.xlu0 %38, %v33
    %v40 = vpop.permute.xlu0 %39
    %43 = vset.pattern.permute.xlu0 0
    %44 = vperm.xlu0 %43, %v34
    %v45 = vpop.permute.xlu0 %44
    %48 = vset.pattern.permute.xlu0 0
    %49 = vperm.xlu0 %48, %v35
    %v50 = vpop.permute.xlu0 %49
    %53 = vset.pattern.permute.xlu0 0
    %54 = vperm.xlu0 %53, %v36
    %v55 = vpop.permute.xlu0 %54
    %vm57 = vcmask 130048
    %v59 = vsel %vm57, %v27, 0
    %v62 = vsel %vm57, %v28, 0
    %v65 = vsel %vm57, %v29, 0
    %v68 = vsel %vm57, %v30, 0
    %70 = vmatpush.msra.mxu0 0.0
    %71 = vmatpush.msra.mxu0 0.0
    %72 = vmatpush.msra.mxu0 0.0
    %73 = vmatpush.msra.mxu0 0.0
    %74 = vmatpush.msra.mxu0 0.0
    %75 = vmatpush.msra.mxu0 0.0
    %76 = vmatpush.msra.mxu0 0.0
    %77 = vmatpush.msra.mxu0 0.0
    %78 = vmatpush.msra.mxu0 0.0
    %79 = vmatpush.msra.mxu0 0.0
    %80 = vmatpush.msra.mxu0 0.0
    %81 = vmatpush.msra.mxu0 0.0
    %82 = vmatpush.msra.mxu0 0.0
    %83 = vmatpush.msra.mxu0 0.0
    %84 = vmatpush.msra.mxu0 %v32
    %85 = vmatpush.msra.mxu0 %v31
    %86 = vmatmul.f32.gmra.mxu0 %v59
    %v87 = vpop.f32.mrf.mxu0
    %v88 = vadd.f32 %v40, %v87
    %89 = vmatmul.f32.gmra.mxu0 %v62
    %v90 = vpop.f32.mrf.mxu0
    %v91 = vadd.f32 %v45, %v90
    %92 = vmatmul.f32.gmra.mxu0 %v65
    %v93 = vpop.f32.mrf.mxu0
    %v94 = vadd.f32 %v50, %v93
    %95 = vmatmul.f32.gmra.mxu0 %v68
    %v96 = vpop.f32.mrf.mxu0
    %v97 = vadd.f32 %v55, %v96
    %98 = vdwg.mxu0
    %v99 = vmax.f32 %v88, 0.0
    %v100 = vmax.f32 %v91, 0.0
    %v101 = vmax.f32 %v94, 0.0
    %v102 = vmax.f32 %v97, 0.0
    %v103 = vld [vmem:[%s3] sm:$0xff]
    %v104 = vld [vmem:[%s3 + $0x8] sm:$0xff]
    %v105 = vld [vmem:[%s3 + $0x10] sm:$0xff]
    %v106 = vld [vmem:[%s3 + $0x18] sm:$0xff]
    %v107 = vld [vmem:[%s4] sm:$0xff]
    %v108 = vld [vmem:[%s4 + $0x8] sm:$0xff]
    %v109 = vld [vmem:[%s4 + $0x10] sm:$0xff]
    %v110 = vld [vmem:[%s4 + $0x18] sm:$0xff]
    %112 = vset.pattern.permute.xlu0 0
    %113 = vperm.xlu0 %112, %v107
    %v114 = vpop.permute.xlu0 %113
    %117 = vset.pattern.permute.xlu0 0
    %118 = vperm.xlu0 %117, %v108
    %v119 = vpop.permute.xlu0 %118
    %122 = vset.pattern.permute.xlu0 0
    %123 = vperm.xlu0 %122, %v109
    %v124 = vpop.permute.xlu0 %123
    %127 = vset.pattern.permute.xlu0 0
    %128 = vperm.xlu0 %127, %v110
    %v129 = vpop.permute.xlu0 %128
    %vm131 = vcmask 261120
    %v133 = vsel %vm131, %v103, 0
    %v136 = vsel %vm131, %v104, 0
    %v139 = vsel %vm131, %v105, 0
    %v142 = vsel %vm131, %v106, 0
    %144 = vmatpush.msra.mxu0 0.0
    %145 = vmatpush.msra.mxu0 0.0
    %146 = vmatpush.msra.mxu0 0.0
    %147 = vmatpush.msra.mxu0 0.0
    %148 = vmatpush.msra.mxu0 0.0
    %149 = vmatpush.msra.mxu0 0.0
    %150 = vmatpush.msra.mxu0 0.0
    %151 = vmatpush.msra.mxu0 0.0
    %152 = vmatpush.msra.mxu0 0.0
    %153 = vmatpush.msra.mxu0 0.0
    %154 = vmatpush.msra.mxu0 0.0
    %155 = vmatpush.msra.mxu0 0.0
    %156 = vmatpush.msra.mxu0 %v102
    %157 = vmatpush.msra.mxu0 %v101
    %158 = vmatpush.msra.mxu0 %v100
    %159 = vmatpush.msra.mxu0 %v99
    %160 = vmatmul.f32.gmra.mxu0 %v133
    %v161 = vpop.f32.mrf.mxu0
    %v162 = vadd.f32 %v114, %v161
    %163 = vmatmul.f32.gmra.mxu0 %v136
    %v164 = vpop.f32.mrf.mxu0
    %v165 = vadd.f32 %v119, %v164
    %166 = vmatmul.f32.gmra.mxu0 %v139
    %v167 = vpop.f32.mrf.mxu0
    %v168 = vadd.f32 %v124, %v167
    %169 = vmatmul.f32.gmra.mxu0 %v142
    %v170 = vpop.f32.mrf.mxu0
    %v171 = vadd.f32 %v129, %v170
    %172 = vdwg.mxu0
    %v173 = vmax.f32 %v162, 0.0
    %v174 = vmax.f32 %v165, 0.0
    %v175 = vmax.f32 %v168, 0.0
    %v176 = vmax.f32 %v171, 0.0
    %s177 = scalar_lea.vmem %s3, 32
    %v178 = vld [vmem:[%s177] sm:$0xff]
    %v179 = vld [vmem:[%s177 + $0x8] sm:$0xff]
    %v180 = vld [vmem:[%s177 + $0x10] sm:$0xff]
    %v181 = vld [vmem:[%s177 + $0x18] sm:$0xff]
    %s182 = scalar_lea.vmem %s4, 32
    %v183 = vld [vmem:[%s182] sm:$0xff]
    %v184 = vld [vmem:[%s182 + $0x8] sm:$0xff]
    %v185 = vld [vmem:[%s182 + $0x10] sm:$0xff]
    %v186 = vld [vmem:[%s182 + $0x18] sm:$0xff]
    %188 = vset.pattern.permute.xlu0 0
    %189 = vperm.xlu0 %188, %v183
    %v190 = vpop.permute.xlu0 %189
    %193 = vset.pattern.permute.xlu0 0
    %194 = vperm.xlu0 %193, %v184
    %v195 = vpop.permute.xlu0 %194
    %198 = vset.pattern.permute.xlu0 0
    %199 = vperm.xlu0 %198, %v185
    %v200 = vpop.permute.xlu0 %199
    %203 = vset.pattern.permute.xlu0 0
    %204 = vperm.xlu0 %203, %v186
    %v205 = vpop.permute.xlu0 %204
    %v208 = vsel %vm131, %v178, 0
    %v211 = vsel %vm131, %v179, 0
    %v214 = vsel %vm131, %v180, 0
    %v217 = vsel %vm131, %v181, 0
    %219 = vmatpush.msra.mxu0 0.0
    %220 = vmatpush.msra.mxu0 0.0
    %221 = vmatpush.msra.mxu0 0.0
    %222 = vmatpush.msra.mxu0 0.0
    %223 = vmatpush.msra.mxu0 0.0
    %224 = vmatpush.msra.mxu0 0.0
    %225 = vmatpush.msra.mxu0 0.0
    %226 = vmatpush.msra.mxu0 0.0
    %227 = vmatpush.msra.mxu0 0.0
    %228 = vmatpush.msra.mxu0 0.0
    %229 = vmatpush.msra.mxu0 0.0
    %230 = vmatpush.msra.mxu0 0.0
    %231 = vmatpush.msra.mxu0 %v176
    %232 = vmatpush.msra.mxu0 %v175
    %233 = vmatpush.msra.mxu0 %v174
    %234 = vmatpush.msra.mxu0 %v173
    %235 = vmatmul.f32.gmra.mxu0 %v208
    %v236 = vpop.f32.mrf.mxu0
    %v237 = vadd.f32 %v190, %v236
    %238 = vmatmul.f32.gmra.mxu0 %v211
    %v239 = vpop.f32.mrf.mxu0
    %v240 = vadd.f32 %v195, %v239
    %241 = vmatmul.f32.gmra.mxu0 %v214
    %v242 = vpop.f32.mrf.mxu0
    %v243 = vadd.f32 %v200, %v242
    %244 = vmatmul.f32.gmra.mxu0 %v217
    %v245 = vpop.f32.mrf.mxu0
    %v246 = vadd.f32 %v205, %v245
    %247 = vdwg.mxu0
    %v248 = vmax.f32 %v237, 0.0
    %v249 = vmax.f32 %v240, 0.0
    %v250 = vmax.f32 %v243, 0.0
    %v251 = vmax.f32 %v246, 0.0
    %s252 = scalar_lea.vmem %s3, 64
    %v253 = vld [vmem:[%s252] sm:$0xff]
    %v254 = vld [vmem:[%s252 + $0x8] sm:$0xff]
    %v255 = vld [vmem:[%s252 + $0x10] sm:$0xff]
    %v256 = vld [vmem:[%s252 + $0x18] sm:$0xff]
    %s257 = scalar_lea.vmem %s4, 64
    %v258 = vld [vmem:[%s257] sm:$0xff]
    %v259 = vld [vmem:[%s257 + $0x8] sm:$0xff]
    %v260 = vld [vmem:[%s257 + $0x10] sm:$0xff]
    %v261 = vld [vmem:[%s257 + $0x18] sm:$0xff]
    %263 = vset.pattern.permute.xlu0 0
    %264 = vperm.xlu0 %263, %v258
    %v265 = vpop.permute.xlu0 %264
    %268 = vset.pattern.permute.xlu0 0
    %269 = vperm.xlu0 %268, %v259
    %v270 = vpop.permute.xlu0 %269
    %273 = vset.pattern.permute.xlu0 0
    %274 = vperm.xlu0 %273, %v260
    %v275 = vpop.permute.xlu0 %274
    %278 = vset.pattern.permute.xlu0 0
    %279 = vperm.xlu0 %278, %v261
    %v280 = vpop.permute.xlu0 %279
    %v283 = vsel %vm131, %v253, 0
    %v286 = vsel %vm131, %v254, 0
    %v289 = vsel %vm131, %v255, 0
    %v292 = vsel %vm131, %v256, 0
    %294 = vmatpush.msra.mxu0 0.0
    %295 = vmatpush.msra.mxu0 0.0
    %296 = vmatpush.msra.mxu0 0.0
    %297 = vmatpush.msra.mxu0 0.0
    %298 = vmatpush.msra.mxu0 0.0
    %299 = vmatpush.msra.mxu0 0.0
    %300 = vmatpush.msra.mxu0 0.0
    %301 = vmatpush.msra.mxu0 0.0
    %302 = vmatpush.msra.mxu0 0.0
    %303 = vmatpush.msra.mxu0 0.0
    %304 = vmatpush.msra.mxu0 0.0
    %305 = vmatpush.msra.mxu0 0.0
    %306 = vmatpush.msra.mxu0 %v251
    %307 = vmatpush.msra.mxu0 %v250
    %308 = vmatpush.msra.mxu0 %v249
    %309 = vmatpush.msra.mxu0 %v248
    %310 = vmatmul.f32.gmra.mxu0 %v283
    %v311 = vpop.f32.mrf.mxu0
    %v312 = vadd.f32 %v265, %v311
    %313 = vmatmul.f32.gmra.mxu0 %v286
    %v314 = vpop.f32.mrf.mxu0
    %v315 = vadd.f32 %v270, %v314
    %316 = vmatmul.f32.gmra.mxu0 %v289
    %v317 = vpop.f32.mrf.mxu0
    %v318 = vadd.f32 %v275, %v317
    %319 = vmatmul.f32.gmra.mxu0 %v292
    %v320 = vpop.f32.mrf.mxu0
    %v321 = vadd.f32 %v280, %v320
    %322 = vdwg.mxu0
    %v323 = vmax.f32 %v312, 0.0
    %v324 = vmax.f32 %v315, 0.0
    %v325 = vmax.f32 %v318, 0.0
    %v326 = vmax.f32 %v321, 0.0
    %s327 = scalar_lea.vmem %s3, 96
    %v328 = vld [vmem:[%s327] sm:$0xff]
    %v329 = vld [vmem:[%s327 + $0x8] sm:$0xff]
    %v330 = vld [vmem:[%s327 + $0x10] sm:$0xff]
    %v331 = vld [vmem:[%s327 + $0x18] sm:$0xff]
    %s332 = scalar_lea.vmem %s4, 96
    %v333 = vld [vmem:[%s332] sm:$0xff]
    %v334 = vld [vmem:[%s332 + $0x8] sm:$0xff]
    %v335 = vld [vmem:[%s332 + $0x10] sm:$0xff]
    %v336 = vld [vmem:[%s332 + $0x18] sm:$0xff]
    %338 = vset.pattern.permute.xlu0 0
    %339 = vperm.xlu0 %338, %v333
    %v340 = vpop.permute.xlu0 %339
    %343 = vset.pattern.permute.xlu0 0
    %344 = vperm.xlu0 %343, %v334
    %v345 = vpop.permute.xlu0 %344
    %348 = vset.pattern.permute.xlu0 0
    %349 = vperm.xlu0 %348, %v335
    %v350 = vpop.permute.xlu0 %349
    %353 = vset.pattern.permute.xlu0 0
    %354 = vperm.xlu0 %353, %v336
    %v355 = vpop.permute.xlu0 %354
    %v358 = vsel %vm131, %v328, 0
    %v361 = vsel %vm131, %v329, 0
    %v364 = vsel %vm131, %v330, 0
    %v367 = vsel %vm131, %v331, 0
    %369 = vmatpush.msra.mxu0 0.0
    %370 = vmatpush.msra.mxu0 0.0
    %371 = vmatpush.msra.mxu0 0.0
    %372 = vmatpush.msra.mxu0 0.0
    %373 = vmatpush.msra.mxu0 0.0
    %374 = vmatpush.msra.mxu0 0.0
    %375 = vmatpush.msra.mxu0 0.0
    %376 = vmatpush.msra.mxu0 0.0
    %377 = vmatpush.msra.mxu0 0.0
    %378 = vmatpush.msra.mxu0 0.0
    %379 = vmatpush.msra.mxu0 0.0
    %380 = vmatpush.msra.mxu0 0.0
    %381 = vmatpush.msra.mxu0 %v326
    %382 = vmatpush.msra.mxu0 %v325
    %383 = vmatpush.msra.mxu0 %v324
    %384 = vmatpush.msra.mxu0 %v323
    %385 = vmatmul.f32.gmra.mxu0 %v358
    %v386 = vpop.f32.mrf.mxu0
    %v387 = vadd.f32 %v340, %v386
    %388 = vmatmul.f32.gmra.mxu0 %v361
    %v389 = vpop.f32.mrf.mxu0
    %v390 = vadd.f32 %v345, %v389
    %391 = vmatmul.f32.gmra.mxu0 %v364
    %v392 = vpop.f32.mrf.mxu0
    %v393 = vadd.f32 %v350, %v392
    %394 = vmatmul.f32.gmra.mxu0 %v367
    %v395 = vpop.f32.mrf.mxu0
    %v396 = vadd.f32 %v355, %v395
    %397 = vdwg.mxu0
    %v398 = vmax.f32 %v387, 0.0
    %v399 = vmax.f32 %v390, 0.0
    %v400 = vmax.f32 %v393, 0.0
    %v401 = vmax.f32 %v396, 0.0
    %v402 = vld [vmem:[%s5] sm:$0xff]
    %v403 = vld [vmem:[%s6] sm:$0xff]
    %405 = vset.pattern.permute.xlu0 0
    %406 = vperm.xlu0 %405, %v403
    %v407 = vpop.permute.xlu0 %406
    %v410 = vsel %vm131, %v402, 0
    %412 = vmatpush.msra.mxu0 0.0
    %413 = vmatpush.msra.mxu0 0.0
    %414 = vmatpush.msra.mxu0 0.0
    %415 = vmatpush.msra.mxu0 0.0
    %416 = vmatpush.msra.mxu0 0.0
    %417 = vmatpush.msra.mxu0 0.0
    %418 = vmatpush.msra.mxu0 0.0
    %419 = vmatpush.msra.mxu0 0.0
    %420 = vmatpush.msra.mxu0 0.0
    %421 = vmatpush.msra.mxu0 0.0
    %422 = vmatpush.msra.mxu0 0.0
    %423 = vmatpush.msra.mxu0 0.0
    %424 = vmatpush.msra.mxu0 %v401
    %425 = vmatpush.msra.mxu0 %v400
    %426 = vmatpush.msra.mxu0 %v399
    %427 = vmatpush.msra.mxu0 %v398
    %428 = vmatmul.f32.gmra.mxu0 %v410
    %v429 = vpop.f32.mrf.mxu0
    %v430 = vadd.f32 %v407, %v429
    %431 = vdwg.mxu0
    %v432 = vxor.u32 %v430, 2147483648
    %v433 = vmul.f32 %v432, 1.442695
    %v434 = vpow.pop %v433
    %v435 = vadd.f32 %v434, 1.0
    %v436 = vrcp.pop %v435
    %v437 = vmul.f32 %v435, %v436
    %v438 = vsub.f32 1.0, %v437
    %v439 = vmul.f32 %v436, %v438
    %v440 = vadd.f32 %v436, %v439
    %vm441 = vweird.f32 %v435
    %vm442 = vweird.f32 %v436
    %vm443 = vmor %vm441, %vm442
    %v444 = vsel %vm443, %v436, %v440
    %v445 = vand.u32 2147483647, %v435
    %vm446 = vcmp.eq.f32.partialorder %v445, 8.507059e+37
    %v447 = vand.u32 %v435, 2147483648
    %v448 = vor.u32 1.1754944e-38, %v447
    %v449 = vsel %vm446, %v448, %v444
    %v450 = vmul.f32 1.0, %v449
    %vm451 = vcmask 64512
    %452 = vst.msk [vmem:[#allocation2] sm:$0xff] %vm451, %v450
    // Predicated region
    $region30: #{tpu_custom_call.1} parent=1 // pred_check
      _
    $region31: #{tpu_custom_call.1} parent=1 // pred_check_branch
      %454 = sbr.rel (0) target = $region33
    $region32: #{tpu_custom_call.1} parent=1 // pred_region
      %456 = vsyncadd [#allocation3], 0
      %s458 = sshll.u32 [#allocation2], 4
      %s459 = int_to_ptr.vmem [resolvable:$true] %s458
      %s460 = sshll.u32 %s7, 4
      %s461 = int_to_ptr.hbm [resolvable:$true] %s460
      %463 = dma.vmem_to_hbm [thread:$0]  %s459, 128, %s461, [#allocation3]
    $region33: #{tpu_custom_call.1} parent=1 // pred_fallthru
      _
    // Predicated region
    $region34: #{tpu_custom_call.1} parent=1 // pred_check
      _
    $region35: #{tpu_custom_call.1} parent=1 // pred_check_branch
      %465 = sbr.rel (0) target = $region37
    $region36: #{tpu_custom_call.1} parent=1 // pred_region
      %467 = dma.done [#allocation3], 128
    $region37: #{tpu_custom_call.1} parent=1 // pred_fallthru
      _
    %468 = vsyncpa [#allocation3], 1

</llo_original>
